<compile_context>
chip_gen: v5e
topology: v5e:2x2
jax: 0.10.0
libtpu: 0.0.40
codegen_flags: <defaults>
</compile_context>

<pallas_src>
import functools
import math

import jax
import jax.numpy as jnp
from jax.experimental import pallas as pl
from jax.experimental.pallas import tpu as pltpu


def attention_block_kernel(x_ref, w_ref, b_ref, o_ref, *, k_size, v_size, sqrt_k):
    """One grid step = one batch element.

    x_ref : (1, T, D)       input sequence (VMEM)
    w_ref : (D, 2K + V)     fused [Wq | Wk | Wv] projection weights
    b_ref : (1, 2K + V)     fused [bq | bk | bv] biases
    o_ref : (1, T, D + V)   concat([x, read], channel axis)
    """
    x = x_ref[0]                                                  # (T, D)

    # Fused Q/K/V projection: one MXU matmul instead of three tiny ones.
    proj = (jnp.dot(x, w_ref[...], preferred_element_type=jnp.float32)
            + b_ref[...])                                         # (T, 2K+V)
    q = proj[:, :k_size]                                          # (T, K)
    k = proj[:, k_size:2 * k_size]                                # (T, K)
    v = proj[:, 2 * k_size:]                                      # (T, V)

    # logits[i, j] = q_i . k_j   (contract last dims; no explicit transpose)
    logits = jax.lax.dot_general(
        q, k, (((1,), (1,)), ((), ())),
        preferred_element_type=jnp.float32)                       # (T, T)

    t = logits.shape[0]
    row = jax.lax.broadcasted_iota(jnp.int32, (t, t), 0)          # query index i
    col = jax.lax.broadcasted_iota(jnp.int32, (t, t), 1)          # key index j
    logits = jnp.where(col > row, jnp.float32(-jnp.inf), logits)  # triu(k=1) mask

    # Softmax over the *query* axis (PyTorch dim=1), then divide by sqrt(K)
    # (exactly the module's post-softmax scaling).
    m = jnp.max(logits, axis=0, keepdims=True)                    # (1, T)
    e = jnp.exp(logits - m)                                       # masked -> 0
    denom = jnp.sum(e, axis=0, keepdims=True)                     # (1, T)
    probs = (e / denom) * jnp.float32(1.0 / sqrt_k)               # (T, T)

    read = jnp.dot(probs, v, preferred_element_type=jnp.float32)  # (T, V)

    # Fused output concat: x is already resident in VMEM -> passthrough is free.
    o_ref[0] = jnp.concatenate([x.astype(jnp.float32), read],
                               axis=-1).astype(o_ref.dtype)


def attention_block(x, params, *, k_size, v_size):
    """x: (B, T, D) float32.  Returns (B, T, D + v_size) like the PyTorch module.

    params use PyTorch nn.Linear layout: weight (out, in), bias (out,).
    """
    B, T, D = x.shape
    N = 2 * k_size + v_size
    sqrt_k = math.sqrt(k_size)

    # Tiny weight prep (negligible HBM): fuse the three projections.
    w_cat = jnp.concatenate(
        [params["query_w"].T, params["key_w"].T, params["value_w"].T], axis=1)  # (D, N)
    b_cat = jnp.concatenate(
        [params["query_b"], params["key_b"], params["value_b"]]).reshape(1, N)

    kernel = functools.partial(attention_block_kernel,
                               k_size=k_size, v_size=v_size, sqrt_k=sqrt_k)

    return pl.pallas_call(
        kernel,
        out_shape=jax.ShapeDtypeStruct((B, T, D + v_size), x.dtype),
        grid_spec=pltpu.PrefetchScalarGridSpec(
            num_scalar_prefetch=0,
            grid=(B,),
            in_specs=[
                pl.BlockSpec((1, T, D), lambda b: (b, 0, 0)),     # x
                pl.BlockSpec((D, N), lambda b: (0, 0)),           # fused weights
                pl.BlockSpec((1, N), lambda b: (0, 0)),           # fused biases
            ],
            out_specs=pl.BlockSpec((1, T, D + v_size), lambda b: (b, 0, 0)),
        ),
        compiler_params=pltpu.CompilerParams(
            dimension_semantics=("parallel",)),
    )(x, w_cat, b_cat)


def attention_block_ref(x, params, *, k_size):
    """Pure-JAX reference mirroring the PyTorch forward (for correctness)."""
    q = x @ params["query_w"].T + params["query_b"]
    k = x @ params["key_w"].T + params["key_b"]
    v = x @ params["value_w"].T + params["value_b"]
    logits = jnp.einsum("bik,bjk->bij", q, k)
    T = x.shape[1]
    mask = jnp.triu(jnp.ones((T, T), dtype=bool), k=1)
    logits = jnp.where(mask[None], -jnp.inf, logits)
    probs = jax.nn.softmax(logits, axis=1) / math.sqrt(k_size)
    read = jnp.einsum("bij,bjv->biv", probs, v)
    return jnp.concatenate([x, read], axis=2)


if __name__ == "__main__":
    key = jax.random.PRNGKey(0)
    kx, kkw, kkb, kqw, kqb, kvw, kvb = jax.random.split(key, 7)

    B, T, D = 2, 8, 32      # batch, seq_len, dims
    K, V = 16, 16           # k_size, v_size

    x = jax.random.normal(kx, (B, T, D), dtype=jnp.float32)

    # nn.Linear-style init: uniform(-1/sqrt(in), 1/sqrt(in)), weight (out, in).
    bound = 1.0 / math.sqrt(D)
    params = {
        "key_w":   jax.random.uniform(kkw, (K, D), jnp.float32, -bound, bound),
        "key_b":   jax.random.uniform(kkb, (K,),   jnp.float32, -bound, bound),
        "query_w": jax.random.uniform(kqw, (K, D), jnp.float32, -bound, bound),
        "query_b": jax.random.uniform(kqb, (K,),   jnp.float32, -bound, bound),
        "value_w": jax.random.uniform(kvw, (V, D), jnp.float32, -bound, bound),
        "value_b": jax.random.uniform(kvb, (V,),   jnp.float32, -bound, bound),
    }

    out = attention_block(x, params, k_size=K, v_size=V)
    out = jax.block_until_ready(out)

    ref = attention_block_ref(x, params, k_size=K)
    assert out.shape == (B, T, D + V), out.shape
    err = float(jnp.max(jnp.abs(out - ref)))
    assert jnp.allclose(out, ref, atol=1e-4, rtol=1e-4), f"mismatch vs reference, max abs err={err}"

    print("KERNEL_OK")
</pallas_src>

<mosaic_0001>
module attributes {stable_mosaic.version = 11 : i64} {
  func.func @attention_block_kernel(%arg0: i32, %arg1: memref<1x8x32xf32, #tpu.memory_space<vmem>>, %arg2: memref<32x48xf32, #tpu.memory_space<vmem>>, %arg3: memref<1x48xf32, #tpu.memory_space<vmem>>, %arg4: memref<1x8x48xf32, #tpu.memory_space<vmem>>) attributes {dimension_semantics = [#tpu.dimension_semantics<parallel>], iteration_bounds = array<i64: 2>, scalar_prefetch = 0 : i64, scratch_operands = 0 : i64, tpu.core_type = #tpu.core_type<tc>, window_params = [{transform_indices = @transform_0, window_bounds = array<i64: 1, 8, 32>}, {pipeline_mode = #tpu.pipeline_mode<synchronous>, transform_indices = @transform_1, window_bounds = array<i64: 32, 48>}, {pipeline_mode = #tpu.pipeline_mode<synchronous>, transform_indices = @transform_2, window_bounds = array<i64: 1, 48>}, {transform_indices = @transform_3, window_bounds = array<i64: 1, 8, 48>}]} {
    %c0 = arith.constant 0 : index
    %c0_0 = arith.constant 0 : index
    %c0_1 = arith.constant 0 : index
    %0 = vector.load %arg1[%c0, %c0_0, %c0_1] : memref<1x8x32xf32, #tpu.memory_space<vmem>>, vector<1x8x32xf32>
    %1 = vector.shape_cast %0 : vector<1x8x32xf32> to vector<8x32xf32>
    %c0_2 = arith.constant 0 : index
    %c0_3 = arith.constant 0 : index
    %2 = vector.load %arg2[%c0_2, %c0_3] : memref<32x48xf32, #tpu.memory_space<vmem>>, vector<32x48xf32>
    %cst = arith.constant dense<0.000000e+00> : vector<8x48xf32>
    %3 = tpu.matmul %1, %2, %cst {dimension_numbers = #tpu.dot_dimension_numbers<[1], [0], [0], [1], [0, 0, 1, 1], [], []>} : vector<8x32xf32>, vector<32x48xf32>, vector<8x48xf32> -> vector<8x48xf32>
    %c0_4 = arith.constant 0 : index
    %c0_5 = arith.constant 0 : index
    %4 = vector.load %arg3[%c0_4, %c0_5] : memref<1x48xf32, #tpu.memory_space<vmem>>, vector<1x48xf32>
    %5 = vector.broadcast %4 : vector<1x48xf32> to vector<8x48xf32>
    %6 = arith.addf %3, %5 : vector<8x48xf32>
    %7 = vector.extract_strided_slice %6 {offsets = [0, 0], sizes = [8, 16], strides = [1, 1]} : vector<8x48xf32> to vector<8x16xf32>
    %8 = vector.extract_strided_slice %6 {offsets = [0, 16], sizes = [8, 16], strides = [1, 1]} : vector<8x48xf32> to vector<8x16xf32>
    %9 = vector.extract_strided_slice %6 {offsets = [0, 32], sizes = [8, 16], strides = [1, 1]} : vector<8x48xf32> to vector<8x16xf32>
    %cst_6 = arith.constant dense<0.000000e+00> : vector<8x8xf32>
    %10 = tpu.matmul %7, %8, %cst_6 {dimension_numbers = #tpu.dot_dimension_numbers<[1], [1], [0], [0], [0, 0, 1, 0], [], []>} : vector<8x16xf32>, vector<8x16xf32>, vector<8x8xf32> -> vector<8x8xf32>
    %11 = tpu.iota {dimensions = array<i32: 0>} : vector<8x8xi32>
    %12 = tpu.iota {dimensions = array<i32: 1>} : vector<8x8xi32>
    %13 = arith.cmpi sgt, %12, %11 : vector<8x8xi32>
    %cst_7 = arith.constant 0xFF800000 : f32
    %14 = vector.broadcast %cst_7 : f32 to vector<8x8xf32>
    %15 = arith.select %13, %14, %10 : vector<8x8xi1>, vector<8x8xf32>
    %cst_8 = arith.constant dense<0xFF800000> : vector<8xf32>
    %16 = vector.multi_reduction <maximumf>, %15, %cst_8 [0] : vector<8x8xf32> to vector<8xf32>
    %17 = vector.shape_cast %16 : vector<8xf32> to vector<1x8xf32>
    %18 = vector.broadcast %17 : vector<1x8xf32> to vector<8x8xf32>
    %19 = arith.subf %15, %18 : vector<8x8xf32>
    %20 = math.exp %19 : vector<8x8xf32>
    %cst_9 = arith.constant dense<0.000000e+00> : vector<8xf32>
    %21 = vector.multi_reduction <add>, %20, %cst_9 [0] : vector<8x8xf32> to vector<8xf32>
    %22 = vector.shape_cast %21 : vector<8xf32> to vector<1x8xf32>
    %23 = vector.broadcast %22 : vector<1x8xf32> to vector<8x8xf32>
    %24 = arith.divf %20, %23 : vector<8x8xf32>
    %cst_10 = arith.constant 2.500000e-01 : f32
    %25 = vector.broadcast %cst_10 : f32 to vector<8x8xf32>
    %26 = arith.mulf %24, %25 : vector<8x8xf32>
    %cst_11 = arith.constant dense<0.000000e+00> : vector<8x16xf32>
    %27 = tpu.matmul %26, %9, %cst_11 {dimension_numbers = #tpu.dot_dimension_numbers<[1], [0], [0], [1], [0, 0, 1, 1], [], []>} : vector<8x8xf32>, vector<8x16xf32>, vector<8x16xf32> -> vector<8x16xf32>
    %28 = tpu.concatenate %1, %27 in 1 : vector<8x32xf32>, vector<8x16xf32> -> vector<8x48xf32>
    %c0_12 = arith.constant 0 : index
    %c0_13 = arith.constant 0 : index
    %c0_14 = arith.constant 0 : index
    %29 = vector.load %arg4[%c0_12, %c0_13, %c0_14] : memref<1x8x48xf32, #tpu.memory_space<vmem>>, vector<1x8x48xf32>
    %30 = vector.shape_cast %29 : vector<1x8x48xf32> to vector<8x48xf32>
    %31 = vector.shape_cast %28 : vector<8x48xf32> to vector<1x8x48xf32>
    tpu.vector_store %arg4[%c0_12, %c0_13, %c0_14], %31 {strides = array<i32>} : memref<1x8x48xf32, #tpu.memory_space<vmem>>, vector<1x8x48xf32>,
    return
  }
  func.func @transform_0(%arg0: i32) -> (i32, i32, i32) {
    %c0_i32 = arith.constant 0 : i32
    %c0_i32_0 = arith.constant 0 : i32
    %c0_i32_1 = arith.constant 0 : i32
    return %arg0, %c0_i32, %c0_i32_0 : i32, i32, i32
  }
  func.func @transform_1(%arg0: i32) -> (i32, i32) {
    %c0_i32 = arith.constant 0 : i32
    %c0_i32_0 = arith.constant 0 : i32
    %c0_i32_1 = arith.constant 0 : i32
    return %c0_i32, %c0_i32_0 : i32, i32
  }
  func.func @transform_2(%arg0: i32) -> (i32, i32) {
    %c0_i32 = arith.constant 0 : i32
    %c0_i32_0 = arith.constant 0 : i32
    %c0_i32_1 = arith.constant 0 : i32
    return %c0_i32, %c0_i32_0 : i32, i32
  }
  func.func @transform_3(%arg0: i32) -> (i32, i32, i32) {
    %c0_i32 = arith.constant 0 : i32
    %c0_i32_0 = arith.constant 0 : i32
    %c0_i32_1 = arith.constant 0 : i32
    return %arg0, %c0_i32, %c0_i32_0 : i32, i32, i32
  }
}

</mosaic_0001>

<llo_original>
// kernel: tpu_custom_call.1
$region0: #{tpu_custom_call.1}
  #allocation0 [shape = 'u32[]', space=smem, size = 0x4, offset = 0x4, fixed_abs, tag = 'smem constant byte address 0x4 - core index']
  #allocation1 [shape = 'u32[72,128]{1,0:T(1,128)}', space=vmem, size = 0x9000, scoped, tag = 'internal scratch']
  %s0 = inlined_call_operand.hbm [shape: f32[2,8,32], index: 0, kind: input, shape index: {}]
  %s1 = inlined_call_operand.hbm [shape: f32[32,48], index: 1, kind: input, shape index: {}]
  %s2 = inlined_call_operand.vmem [shape: f32[1,48], index: 2, kind: input, shape index: {}]
  %s3 = inlined_call_operand.hbm [shape: f32[2,8,48], index: 3, kind: output, shape index: {}]
  %s4 = sld [smem:[#allocation0]]
  $region53: #{tpu_custom_call.1} parent=0
    _
  %s6 = ssub.s32 1, %s4
  %s7 = scalar_select 0, %s6, %s4
  $region1: #{tpu_custom_call.1} parent=0
    #allocation2 [shape = 'u8[8192]{0}', space=vmem, size = 0x2000, scoped, tag = 'input window, operand 0']
    #allocation3 [shape = 's32[2]{0}', space=sflag, size = 0x8, scoped, tag = 'scoped memory for tpu_custom_call.1']
    #allocation4 [shape = 's32[2]{0}', space=sflag, size = 0x8, scoped, tag = 'scoped memory for tpu_custom_call.1']
    #allocation5 [shape = 'u8[16384]{0}', space=vmem, size = 0x4000, scoped, tag = 'input window, operand 1, single buffered']
    #allocation6 [shape = 's32[1]{0}', space=sflag, size = 0x4, scoped, tag = 'scoped memory for tpu_custom_call.1']
    #allocation7 [shape = 'u8[8192]{0}', space=vmem, size = 0x2000, scoped, tag = 'output window, operand 0']
    %8 = vsyncpa [#allocation3], 0
    %s9 = scalar_lea.sflag [#allocation3], 1
    %10 = vsyncpa %s9, 0
    %11 = vsyncpa [#allocation6], 0
    %12 = vsyncpa [#allocation4], 0
    %s13 = scalar_lea.sflag [#allocation4], 1
    %14 = vsyncpa %s13, 0
    loop: start=0, step=1, limit=4
    $region2: #{tpu_custom_call.1} parent=1 // loop_pre_header
      _
    $region3: #{tpu_custom_call.1} parent=1 // loop_header
      %s16 = sphi 0, %s20
      %p17 = scmp.ge.s32.totalorder %s16, 4
      %s26 = sphi 0, %s28
      %s29 = sphi 0, %s26
      %s30 = sphi 0, %s29
      %s46 = sphi 0, %s30
      %s50 = sphi 0, %s50
      %s52 = sphi 0, %s50
      %s53 = sphi 0, %s52
      %s67 = sphi 0, %s53
      %s71 = sphi 0, %s71
      %s73 = sphi 0, %s71
      %s74 = sphi 0, %s73
      %s88 = sphi 0, %s74
      %s94 = sphi 0, %s96
      %s97 = sphi 0, %s94
      %s98 = sphi 0, %s97
      %s114 = sphi 0, %s98
    $region4: #{tpu_custom_call.1} parent=1 // loop_header_branch
      %19 = sbr.rel (%p17) target = $region8
    $region5: #{tpu_custom_call.1} parent=1 // loop_body
      %s21 = ssub.s32 %s16, 1
      %s22 = ssub.s32 %s16, 2
      %s23 = sadd.s32 %s16, 1
      %s24 = ssub.s32 %s16, %s23
      %p25 = scmp.eq.s32.totalorder %s24, 0
      %s27 = sadd.s32 %s26, 1
      %s28 = scalar_select %p25, %s26, %s27
      %p31 = pneg %p25
      %p32 = scmp.eq.s32.totalorder %s16, 1
      %p33 = por %p31, %p32
      %p34 = scmp.ne.s32.totalorder %s26, %s29
      %p35 = scmp.eq.s32.totalorder %s16, 0
      %p36 = por %p34, %p35
      %p37 = scmp.ne.s32.totalorder %s26, %s29
      %p38 = scmp.eq.s32.totalorder %s21, 1
      %p39 = por %p37, %p38
      %p40 = scmp.ne.s32.totalorder %s29, %s30
      %p41 = scmp.eq.s32.totalorder %s21, 0
      %p42 = por %p40, %p41
      %p43 = scmp.ne.s32.totalorder %s29, %s30
      %p44 = scmp.eq.s32.totalorder %s22, 1
      %p45 = por %p43, %p44
      %p47 = scmp.ne.s32.totalorder %s30, %s46
      %p48 = scmp.eq.s32.totalorder %s22, 0
      %p49 = por %p47, %p48
      %s51 = sadd.s32 %s50, 1
      %p54 = scmp.eq.s32.totalorder %s16, 1
      %p55 = scmp.ne.s32.totalorder %s50, %s52
      %p56 = scmp.eq.s32.totalorder %s16, 0
      %p57 = por %p55, %p56
      %p58 = scmp.ne.s32.totalorder %s50, %s52
      %p59 = scmp.eq.s32.totalorder %s21, 1
      %p60 = por %p58, %p59
      %p61 = scmp.ne.s32.totalorder %s52, %s53
      %p62 = scmp.eq.s32.totalorder %s21, 0
      %p63 = por %p61, %p62
      %p64 = scmp.ne.s32.totalorder %s52, %s53
      %p65 = scmp.eq.s32.totalorder %s22, 1
      %p66 = por %p64, %p65
      %p68 = scmp.ne.s32.totalorder %s53, %s67
      %p69 = scmp.eq.s32.totalorder %s22, 0
      %p70 = por %p68, %p69
      %s72 = sadd.s32 %s71, 1
      %p75 = scmp.eq.s32.totalorder %s16, 1
      %p76 = scmp.ne.s32.totalorder %s71, %s73
      %p77 = scmp.eq.s32.totalorder %s16, 0
      %p78 = por %p76, %p77
      %p79 = scmp.ne.s32.totalorder %s71, %s73
      %p80 = scmp.eq.s32.totalorder %s21, 1
      %p81 = por %p79, %p80
      %p82 = scmp.ne.s32.totalorder %s73, %s74
      %p83 = scmp.eq.s32.totalorder %s21, 0
      %p84 = por %p82, %p83
      %p85 = scmp.ne.s32.totalorder %s73, %s74
      %p86 = scmp.eq.s32.totalorder %s22, 1
      %p87 = por %p85, %p86
      %p89 = scmp.ne.s32.totalorder %s74, %s88
      %p90 = scmp.eq.s32.totalorder %s22, 0
      %p91 = por %p89, %p90
      %s92 = ssub.s32 %s16, %s23
      %p93 = scmp.eq.s32.totalorder %s92, 0
      %s95 = sadd.s32 %s94, 1
      %s96 = scalar_select %p93, %s94, %s95
      %p99 = pneg %p93
      %p100 = scmp.eq.s32.totalorder %s16, 1
      %p101 = por %p99, %p100
      %p102 = scmp.ne.s32.totalorder %s94, %s97
      %p103 = scmp.eq.s32.totalorder %s16, 0
      %p104 = por %p102, %p103
      %p105 = scmp.ne.s32.totalorder %s94, %s97
      %p106 = scmp.eq.s32.totalorder %s21, 1
      %p107 = por %p105, %p106
      %p108 = scmp.ne.s32.totalorder %s97, %s98
      %p109 = scmp.eq.s32.totalorder %s21, 0
      %p110 = por %p108, %p109
      %p111 = scmp.ne.s32.totalorder %s97, %s98
      %p112 = scmp.eq.s32.totalorder %s22, 1
      %p113 = por %p111, %p112
      %p115 = scmp.ne.s32.totalorder %s98, %s114
      %p116 = scmp.eq.s32.totalorder %s22, 0
      %p117 = por %p115, %p116
      %p118 = scmp.le.s32.totalorder 1, %s16
      %p119 = scmp.lt.s32.totalorder %s16, 3
      %p120 = pnand %p118, %p119
      %p121 = pneg %p120
      // Predicated region
      $region9: #{tpu_custom_call.1} parent=5 // pred_check
        _
      $region10: #{tpu_custom_call.1} parent=5 // pred_check_branch
        %123 = sbr.rel (%p120) target = $region12
      $region11: #{tpu_custom_call.1} parent=5 // pred_region
        %s124 = ssub.s32 %s16, 1
        // Predicated region
        $region13: #{tpu_custom_call.1} parent=11 // pred_check
          %p125 = pneg %p63
        $region14: #{tpu_custom_call.1} parent=11 // pred_check_branch
          %127 = sbr.rel (%p125) target = $region16
        $region15: #{tpu_custom_call.1} parent=11 // pred_region
          %129 = vsyncadd [#allocation6], 0
          %s130 = sshll.u32 %s1, 4
          %s131 = int_to_ptr.hbm [resolvable:$true] %s130
          %s132 = sshll.u32 [#allocation5], 4
          %s133 = int_to_ptr.vmem [resolvable:$true] %s132
          %138 = dma.hbm_to_vmem [thread:$0]  %s131, 512, %s133, [#allocation6], 128, 128, 8
        $region16: #{tpu_custom_call.1} parent=11 // pred_fallthru
          _
        // Predicated region
        $region17: #{tpu_custom_call.1} parent=11 // pred_check
          %p139 = pneg %p84
        $region18: #{tpu_custom_call.1} parent=11 // pred_check_branch
          %141 = sbr.rel (%p139) target = $region20
        $region19: #{tpu_custom_call.1} parent=11 // pred_region
          _
        $region20: #{tpu_custom_call.1} parent=11 // pred_fallthru
          _
      $region12: #{tpu_custom_call.1} parent=5 // pred_fallthru
        _
      %p142 = scmp.lt.s32.totalorder %s16, 2
      // Predicated region
      $region21: #{tpu_custom_call.1} parent=5 // pred_check
        %p143 = pneg %p142
      $region22: #{tpu_custom_call.1} parent=5 // pred_check_branch
        %145 = sbr.rel (%p143) target = $region24
      $region23: #{tpu_custom_call.1} parent=5 // pred_region
        // Predicated region
        $region25: #{tpu_custom_call.1} parent=23 // pred_check
          %p146 = pneg %p36
        $region26: #{tpu_custom_call.1} parent=23 // pred_check_branch
          %148 = sbr.rel (%p146) target = $region28
        $region27: #{tpu_custom_call.1} parent=23 // pred_region
          %s149 = sand.u32 %s26, 1
          %s150 = scalar_lea.sflag [#allocation3], %s149
          %s151 = sand.u32 %s26, 1
          %s152 = smul.addr %s151, 8
          %s153 = scalar_lea.vmem [#allocation2], %s152
          %155 = vsyncadd %s150, 0
          %s156 = smul.addr %s16, 8
          %s157 = scalar_lea.hbm %s0, %s156
          %s159 = sshll.u32 %s157, 4
          %s160 = int_to_ptr.hbm [resolvable:$true] %s159
          %s161 = sshll.u32 %s153, 4
          %s162 = int_to_ptr.vmem [resolvable:$true] %s161
          %164 = dma.hbm_to_vmem [thread:$0]  %s160, 128, %s162, %s150
        $region28: #{tpu_custom_call.1} parent=23 // pred_fallthru
          _
      $region24: #{tpu_custom_call.1} parent=5 // pred_fallthru
        _
      %p165 = scmp.le.s32.totalorder 1, %s16
      %p166 = scmp.lt.s32.totalorder %s16, 3
      %p167 = pnand %p165, %p166
      %p168 = pneg %p167
      // Predicated region
      $region29: #{tpu_custom_call.1} parent=5 // pred_check
        _
      $region30: #{tpu_custom_call.1} parent=5 // pred_check_branch
        %170 = sbr.rel (%p167) target = $region32
      $region31: #{tpu_custom_call.1} parent=5 // pred_region
        %s171 = ssub.s32 %s16, 1
        %s172 = sand.u32 %s29, 1
        %s173 = scalar_lea.sflag [#allocation3], %s172
        %s174 = sand.u32 %s29, 1
        %s175 = smul.addr %s174, 8
        %s176 = scalar_lea.vmem [#allocation2], %s175
        // Predicated region
        $region33: #{tpu_custom_call.1} parent=31 // pred_check
          %p177 = pneg %p42
        $region34: #{tpu_custom_call.1} parent=31 // pred_check_branch
          %179 = sbr.rel (%p177) target = $region36
        $region35: #{tpu_custom_call.1} parent=31 // pred_region
          %181 = dma.done %s173, 128
        $region36: #{tpu_custom_call.1} parent=31 // pred_fallthru
          _
        // Predicated region
        $region37: #{tpu_custom_call.1} parent=31 // pred_check
          %p182 = pneg %p63
        $region38: #{tpu_custom_call.1} parent=31 // pred_check_branch
          %184 = sbr.rel (%p182) target = $region40
        $region39: #{tpu_custom_call.1} parent=31 // pred_region
          %186 = dma.done [#allocation6], 512
        $region40: #{tpu_custom_call.1} parent=31 // pred_fallthru
          _
        %s187 = sand.u32 %s29, 1
        %s188 = scalar_lea.sflag [#allocation3], %s187
        %s189 = sand.u32 %s29, 1
        %s190 = smul.addr %s189, 8
        %s191 = scalar_lea.vmem [#allocation2], %s190
        %p192 = pneg %p42
        %p193 = pneg %p39
        %p194 = pneg %p63
        %p195 = pneg %p60
        %p196 = pneg %p84
        %p197 = pneg %p81
        %p198 = pneg %p110
        %p199 = pneg %p107
        %s200 = sand.u32 %s97, 1
        %s201 = scalar_lea.sflag [#allocation4], %s200
        %s202 = sand.u32 %s97, 1
        %s203 = smul.addr %s202, 8
        %s204 = scalar_lea.vmem [#allocation7], %s203
        %v205 = vld [vmem:[%s176] sm:$0xff]
        %v206 = vld [vmem:[#allocation5] sm:$0xff]
        %v207 = vld [vmem:[#allocation5 + $0x8] sm:$0xff]
        %v208 = vld [vmem:[#allocation5 + $0x10] sm:$0xff]
        %v209 = vld [vmem:[#allocation5 + $0x18] sm:$0xff]
        %v210 = vld [vmem:[%s2] sm:$0x1]
        %v212 = vperm.slane %v210, 0
        %vm214 = vcmask 261120
        %v216 = vsel %vm214, %v205, 0
        %218 = vmatpush.msra.mxu0 0.0
        %219 = vmatpush.msra.mxu0 0.0
        %220 = vmatpush.msra.mxu0 0.0
        %221 = vmatpush.msra.mxu0 0.0
        %222 = vmatpush.msra.mxu0 0.0
        %223 = vmatpush.msra.mxu0 0.0
        %224 = vmatpush.msra.mxu0 0.0
        %225 = vmatpush.msra.mxu0 0.0
        %226 = vmatpush.msra.mxu0 0.0
        %227 = vmatpush.msra.mxu0 0.0
        %228 = vmatpush.msra.mxu0 0.0
        %229 = vmatpush.msra.mxu0 0.0
        %230 = vmatpush.msra.mxu0 %v209
        %231 = vmatpush.msra.mxu0 %v208
        %232 = vmatpush.msra.mxu0 %v207
        %233 = vmatpush.msra.mxu0 %v206
        %234 = vmatmul.f32.gmra.mxu0 %v216
        %v235 = vpop.f32.mrf.mxu0
        %v236 = vadd.f32 %v212, %v235
        %237 = vdwg.mxu0
        %239 = vrot.lane.b32.xlu0 %v236, 112
        %v240 = vpop.permute.xlu0 %239
        %vm241 = vcmask 130048
        %v242 = vsel %vm241, %v236, 0
        %v244 = vsel %vm241, %v240, 0
        %246 = vmatpush.xpose.msra.mxu0 0.0
        %247 = vmatpush.xpose.msra.mxu0 0.0
        %248 = vmatpush.xpose.msra.mxu0 0.0
        %249 = vmatpush.xpose.msra.mxu0 0.0
        %250 = vmatpush.xpose.msra.mxu0 0.0
        %251 = vmatpush.xpose.msra.mxu0 0.0
        %252 = vmatpush.xpose.msra.mxu0 0.0
        %253 = vmatpush.xpose.msra.mxu0 0.0
        %254 = vmatpush.xpose.msra.mxu0 0.0
        %255 = vmatpush.xpose.msra.mxu0 0.0
        %256 = vmatpush.xpose.msra.mxu0 0.0
        %257 = vmatpush.xpose.msra.mxu0 0.0
        %258 = vmatpush.xpose.msra.mxu0 0.0
        %259 = vmatpush.xpose.msra.mxu0 0.0
        %260 = vmatpush.xpose.msra.mxu0 0.0
        %261 = vmatpush.xpose.msra.mxu0 %v244
        %262 = vmatmul.f32.gmra.mxu0 %v242
        %v263 = vpop.f32.mrf.mxu0
        %v264 = vadd.f32 0.0, %v263
        %265 = vdwg.mxu0
        %v266 = vlaneseq
        %v267 = vshrl.u32 %v266, 7
        %v268 = vlaneseq
        %v269 = vand.u32 %v268, 127
        %vm270 = vcmp.gt.s32.totalorder %v269, %v267
        %v271 = vsel %vm270, -inf, %v264
        %vm272 = vcmask 64512
        %v273 = vsel %vm272, %v271, -inf
        %v274 = vrot.slane %v273, 4
        %v275 = vmax.f32 %v273, %v274
        %v276 = vrot.slane %v275, 2
        %v277 = vmax.f32 %v275, %v276
        %v278 = vrot.slane %v277, 1
        %v279 = vmax.f32 %v277, %v278
        %v280 = vsub.f32 %v271, %v279
        %v281 = vmul.f32 %v280, 1.442695
        %v282 = vpow.pop %v281
        %v283 = vsel %vm272, %v282, 0.0
        %v284 = vrot.slane %v283, 4
        %v285 = vadd.f32 %v283, %v284
        %v286 = vrot.slane %v285, 2
        %v287 = vadd.f32 %v285, %v286
        %v288 = vrot.slane %v287, 1
        %v289 = vadd.f32 %v287, %v288
        %v290 = vrcp.pop %v289
        %v291 = vmul.f32 %v289, %v290
        %v292 = vsub.f32 1.0, %v291
        %v293 = vmul.f32 %v290, %v292
        %v294 = vadd.f32 %v290, %v293
        %vm295 = vweird.f32 %v289
        %vm296 = vweird.f32 %v290
        %vm297 = vmor %vm295, %vm296
        %v298 = vsel %vm297, %v290, %v294
        %v299 = vand.u32 2147483647, %v289
        %vm300 = vcmp.eq.f32.partialorder %v299, 8.507059e+37
        %v301 = vand.u32 %v289, 2147483648
        %v302 = vor.u32 1.1754944e-38, %v301
        %v303 = vsel %vm300, %v302, %v298
        %v304 = vmul.f32 %v282, %v303
        %v305 = vmul.f32 %v304, 0.25
        %306 = vrot.lane.b32.xlu0 %v236, 96
        %v307 = vpop.permute.xlu0 %306
        %v310 = vsel %vm272, %v305, 0
        %312 = vmatpush.msra.mxu0 0.0
        %313 = vmatpush.msra.mxu0 0.0
        %314 = vmatpush.msra.mxu0 0.0
        %315 = vmatpush.msra.mxu0 0.0
        %316 = vmatpush.msra.mxu0 0.0
        %317 = vmatpush.msra.mxu0 0.0
        %318 = vmatpush.msra.mxu0 0.0
        %319 = vmatpush.msra.mxu0 0.0
        %320 = vmatpush.msra.mxu0 0.0
        %321 = vmatpush.msra.mxu0 0.0
        %322 = vmatpush.msra.mxu0 0.0
        %323 = vmatpush.msra.mxu0 0.0
        %324 = vmatpush.msra.mxu0 0.0
        %325 = vmatpush.msra.mxu0 0.0
        %326 = vmatpush.msra.mxu0 0.0
        %327 = vmatpush.msra.mxu0 %v307
        %328 = vmatmul.f32.gmra.mxu0 %v310
        %v329 = vpop.f32.mrf.mxu0
        %v330 = vadd.f32 0.0, %v329
        %331 = vdwg.mxu0
        %333 = vrot.lane.b32.xlu0 %v330, 32
        %v334 = vpop.permute.xlu0 %333
        %v336 = vsel %vm214, %v205, %v334
        %vm337 = vcmask 392192
        %338 = vst.msk [vmem:[%s204] sm:$0xff] %vm337, %v336
        %s339 = sand.u32 %s97, 1
        %s340 = scalar_lea.sflag [#allocation4], %s339
        %s341 = sand.u32 %s97, 1
        %s342 = smul.addr %s341, 8
        %s343 = scalar_lea.vmem [#allocation7], %s342
        // Predicated region
        $region41: #{tpu_custom_call.1} parent=31 // pred_check
          %p344 = pneg %p107
        $region42: #{tpu_custom_call.1} parent=31 // pred_check_branch
          %346 = sbr.rel (%p344) target = $region44
        $region43: #{tpu_custom_call.1} parent=31 // pred_region
          %348 = vsyncadd %s340, 0
          %s349 = smul.addr %s21, 8
          %s350 = scalar_lea.hbm %s3, %s349
          %s352 = sshll.u32 %s343, 4
          %s353 = int_to_ptr.vmem [resolvable:$true] %s352
          %s354 = sshll.u32 %s350, 4
          %s355 = int_to_ptr.hbm [resolvable:$true] %s354
          %357 = dma.vmem_to_hbm [thread:$0]  %s353, 128, %s355, %s340
        $region44: #{tpu_custom_call.1} parent=31 // pred_fallthru
          _
      $region32: #{tpu_custom_call.1} parent=5 // pred_fallthru
        _
      %p358 = scmp.le.s32.totalorder 2, %s16
      // Predicated region
      $region45: #{tpu_custom_call.1} parent=5 // pred_check
        %p359 = pneg %p358
      $region46: #{tpu_custom_call.1} parent=5 // pred_check_branch
        %361 = sbr.rel (%p359) target = $region48
      $region47: #{tpu_custom_call.1} parent=5 // pred_region
        %s362 = ssub.s32 %s16, 2
        // Predicated region
        $region49: #{tpu_custom_call.1} parent=47 // pred_check
          %p363 = pneg %p113
        $region50: #{tpu_custom_call.1} parent=47 // pred_check_branch
          %365 = sbr.rel (%p363) target = $region52
        $region51: #{tpu_custom_call.1} parent=47 // pred_region
          %s366 = sand.u32 %s98, 1
          %s367 = scalar_lea.sflag [#allocation4], %s366
          %s368 = sand.u32 %s98, 1
          %s369 = smul.addr %s368, 8
          %s370 = scalar_lea.vmem [#allocation7], %s369
          %372 = dma.done %s367, 128
        $region52: #{tpu_custom_call.1} parent=47 // pred_fallthru
          _
      $region48: #{tpu_custom_call.1} parent=5 // pred_fallthru
        _
    $region6: #{tpu_custom_call.1} parent=1 // loop_footer
      %s20 = sadd.s32 1, %s16
    $region7: #{tpu_custom_call.1} parent=1 // loop_footer_branch
      %15 = sbr.rel target = $region3
    $region8: #{tpu_custom_call.1} parent=1 // loop_exit
      _
    %373 = vsyncpa [#allocation3], 1
    %s374 = scalar_lea.sflag [#allocation3], 1
    %375 = vsyncpa %s374, 1
    %376 = vsyncpa [#allocation6], 1
    %377 = vsyncpa [#allocation4], 1
    %s378 = scalar_lea.sflag [#allocation4], 1
    %379 = vsyncpa %s378, 1

</llo_original>
